<compile_context>
chip_gen: v7x
topology: tpu7x:2x2x1
jax: 0.10.0
libtpu: 0.0.40
codegen_flags: <defaults>
</compile_context>

<pallas_src>
import jax
import jax.numpy as jnp
from jax.experimental import pallas as pl
from jax.experimental.pallas import tpu as pltpu

LANE = 128                      # lane width: hidden dim padded to this
MAX_TILE_B = 4096               # batch rows per grid step (multiple of 16)
VMEM_LIMIT_BYTES = 32 * 1024 * 1024   # fits v5e/v6e/v7x; ~2x headroom at tile 4096


def _round_up(n: int, m: int) -> int:
    return ((n + m - 1) // m) * m


def mlp_kernel(x_ref, w1_ref, b1_ref, w2_ref, b2_ref, w3_ref, b3_ref, o_ref):
    # x tile: [TILE_B, d_in] f32 (un-padded K); cast to bf16 in-kernel (VPU, free).
    # Weights: bf16, VMEM-resident across the grid. Biases: f32.
    # All matmuls accumulate in f32 on the MXU.
    x = x_ref[...].astype(jnp.bfloat16)
    h1 = jnp.dot(x, w1_ref[...], preferred_element_type=jnp.float32)
    h1 = jnp.maximum(h1 + b1_ref[...], 0.0)                 # ReLU(fc1)
    # dropout (eval mode) == identity
    h2 = jnp.dot(h1.astype(jnp.bfloat16), w2_ref[...],
                 preferred_element_type=jnp.float32)
    h2 = jnp.maximum(h2 + b2_ref[...], 0.0)                 # ReLU(fc2)
    # dropout (eval mode) == identity
    out = jnp.dot(h2.astype(jnp.bfloat16), w3_ref[...],
                  preferred_element_type=jnp.float32)
    o_ref[...] = (out + b3_ref[...]).astype(o_ref.dtype)    # fc3: only real cols


def simple_traffic_model(x, params, *, max_tile_b: int = MAX_TILE_B):
    """x: [batch, input_dim] float32. params: dict of (w1,b1,w2,b2,w3,b3)
    with weights stored [in, out] (transposed vs. PyTorch's [out, in])."""
    w1, b1, w2, b2, w3, b3 = (params[k] for k in ("w1", "b1", "w2", "b2", "w3", "b3"))
    b1, b2, b3 = (b.reshape(1, -1) for b in (b1, b2, b3))
    batch, d_in = x.shape
    hidden = w1.shape[1]
    n_cls = w3.shape[1]

    # Only the hidden dim is padded (to 128 lanes). Weights are tiny & resident,
    # zero-padded lanes stay zero through bias+ReLU, so numerics are unchanged.
    hp = _round_up(hidden, LANE)
    w1p = jnp.pad(w1, ((0, 0), (0, hp - hidden))).astype(jnp.bfloat16)        # (d_in, hp)
    w2p = jnp.pad(w2, ((0, hp - hidden), (0, hp - hidden))).astype(jnp.bfloat16)  # (hp, hp)
    w3p = jnp.pad(w3, ((0, hp - hidden), (0, 0))).astype(jnp.bfloat16)        # (hp, n_cls)
    b1p = jnp.pad(b1, ((0, 0), (0, hp - hidden)))                              # (1, hp) f32
    b2p = jnp.pad(b2, ((0, 0), (0, hp - hidden)))                              # (1, hp) f32
    # b3 stays (1, n_cls) f32

    # Batch tiling: multiple of 16 (bf16 sublane packing), capped so the grid
    # has >=2 steps when possible (v7x megacore). Ragged last tile is handled
    # by Pallas partial blocks -- no wrapper pad/slice.
    tile_b = max(16, min(max_tile_b, _round_up(pl.cdiv(batch, 2), 16)))
    grid = (pl.cdiv(batch, tile_b),)
    const = lambda i: (0, 0)   # weights/biases: same block every step (resident)

    flops = 2 * batch * (d_in * hp + hp * hp + hp * n_cls)
    bytes_accessed = (
        batch * d_in * 4                               # f32 activations in
        + batch * n_cls * 4                            # f32 logits out (narrow)
        + (w1p.size + w2p.size + w3p.size) * 2         # bf16 weights
        + (b1p.size + b2p.size + b3.size) * 4          # f32 biases
    )

    out = pl.pallas_call(
        mlp_kernel,
        out_shape=jax.ShapeDtypeStruct((batch, n_cls), jnp.float32),
        grid=grid,
        in_specs=[
            pl.BlockSpec((tile_b, d_in), lambda i: (i, 0)),  # x: tiled over batch, K un-padded
            pl.BlockSpec((d_in, hp), const),                 # w1 resident (full array)
            pl.BlockSpec((1, hp), const),                    # b1 resident
            pl.BlockSpec((hp, hp), const),                   # w2 resident
            pl.BlockSpec((1, hp), const),                    # b2 resident
            pl.BlockSpec((hp, n_cls), const),                # w3 resident (narrow N)
            pl.BlockSpec((1, n_cls), const),                 # b3 resident
        ],
        out_specs=pl.BlockSpec((tile_b, n_cls), lambda i: (i, 0)),  # dense 8 B/row writeback
        compiler_params=pltpu.CompilerParams(
            dimension_semantics=("parallel",),               # megacore on v7x
            vmem_limit_bytes=VMEM_LIMIT_BYTES),
        cost_estimate=pl.CostEstimate(
            flops=flops, bytes_accessed=bytes_accessed, transcendentals=0),
    )(x, w1p, b1p, w2p, b2p, w3p, b3)

    return out


def init_params(key, input_dim=10, hidden_dim=20, num_classes=2):
    """Deterministic init mimicking torch.nn.Linear's U(-1/sqrt(fan_in), +1/sqrt(fan_in))."""
    ks = jax.random.split(key, 6)

    def linear(kw, kb, fan_in, fan_out):
        bound = 1.0 / jnp.sqrt(jnp.float32(fan_in))
        # Stored as [in, out] (transposed vs. PyTorch's [out, in]).
        w = jax.random.uniform(kw, (fan_in, fan_out), jnp.float32, -bound, bound)
        b = jax.random.uniform(kb, (1, fan_out), jnp.float32, -bound, bound)
        return w, b

    w1, b1 = linear(ks[0], ks[1], input_dim, hidden_dim)
    w2, b2 = linear(ks[2], ks[3], hidden_dim, hidden_dim)
    w3, b3 = linear(ks[4], ks[5], hidden_dim, num_classes)
    return {"w1": w1, "b1": b1, "w2": w2, "b2": b2, "w3": w3, "b3": b3}


def reference_f32(x, p):
    """Pure-f32 reference of the PyTorch forward (eval-mode dropout = identity)."""
    h1 = jnp.maximum(x @ p["w1"] + p["b1"], 0.0)
    h2 = jnp.maximum(h1 @ p["w2"] + p["b2"], 0.0)
    return h2 @ p["w3"] + p["b3"]


def reference_bf16(x, p):
    """Reference matching the kernel's precision (bf16 operands, f32 accumulate)."""
    bf = lambda a: a.astype(jnp.bfloat16).astype(jnp.float32)
    h1 = jnp.maximum(bf(x) @ bf(p["w1"]) + p["b1"], 0.0)
    h2 = jnp.maximum(bf(h1) @ bf(p["w2"]) + p["b2"], 0.0)
    return bf(h2) @ bf(p["w3"]) + p["b3"]


if __name__ == "__main__":
    key = jax.random.PRNGKey(0)
    k_params, k_x = jax.random.split(key)

    input_dim, hidden_dim, num_classes = 10, 20, 2
    batch = 8

    params = init_params(k_params, input_dim, hidden_dim, num_classes)
    x = jax.random.normal(k_x, (batch, input_dim), dtype=jnp.float32)

    out = simple_traffic_model(x, params)
    jax.block_until_ready(out)

    assert out.shape == (batch, num_classes), out.shape
    # Tight check vs a reference that matches the kernel's bf16/f32 precision.
    ref_bf16 = reference_bf16(x, params)
    assert jnp.allclose(out, ref_bf16, atol=1e-3, rtol=1e-3), "mismatch vs bf16-matched reference"
    # Looser sanity check vs the pure-f32 PyTorch-equivalent forward.
    ref_f32 = reference_f32(x, params)
    assert jnp.allclose(out, ref_f32, atol=5e-2, rtol=5e-2), "mismatch vs f32 reference"

    print("KERNEL_OK")
</pallas_src>

<mosaic_0001>
module attributes {stable_mosaic.version = 11 : i64} {
  func.func @mlp_kernel(%arg0: i32, %arg1: memref<16x10xf32, #tpu.memory_space<vmem>>, %arg2: memref<10x128xbf16, #tpu.memory_space<vmem>>, %arg3: memref<1x128xf32, #tpu.memory_space<vmem>>, %arg4: memref<128x128xbf16, #tpu.memory_space<vmem>>, %arg5: memref<1x128xf32, #tpu.memory_space<vmem>>, %arg6: memref<128x2xbf16, #tpu.memory_space<vmem>>, %arg7: memref<1x2xf32, #tpu.memory_space<vmem>>, %arg8: memref<16x2xf32, #tpu.memory_space<vmem>>) attributes {dimension_semantics = [#tpu.dimension_semantics<parallel>], iteration_bounds = array<i64: 1>, scalar_prefetch = 0 : i64, scratch_operands = 0 : i64, tpu.core_type = #tpu.core_type<tc>, window_params = [{transform_indices = @transform_0, window_bounds = array<i64: 16, 10>}, {pipeline_mode = #tpu.pipeline_mode<synchronous>, transform_indices = @transform_1, window_bounds = array<i64: 10, 128>}, {pipeline_mode = #tpu.pipeline_mode<synchronous>, transform_indices = @transform_2, window_bounds = array<i64: 1, 128>}, {pipeline_mode = #tpu.pipeline_mode<synchronous>, transform_indices = @transform_3, window_bounds = array<i64: 128, 128>}, {pipeline_mode = #tpu.pipeline_mode<synchronous>, transform_indices = @transform_4, window_bounds = array<i64: 1, 128>}, {pipeline_mode = #tpu.pipeline_mode<synchronous>, transform_indices = @transform_5, window_bounds = array<i64: 128, 2>}, {pipeline_mode = #tpu.pipeline_mode<synchronous>, transform_indices = @transform_6, window_bounds = array<i64: 1, 2>}, {transform_indices = @transform_7, window_bounds = array<i64: 16, 2>}]} {
    %c0 = arith.constant 0 : index
    %c0_0 = arith.constant 0 : index
    %0 = vector.load %arg1[%c0, %c0_0] : memref<16x10xf32, #tpu.memory_space<vmem>>, vector<16x10xf32>
    %1 = arith.truncf %0 : vector<16x10xf32> to vector<16x10xbf16>
    %c0_1 = arith.constant 0 : index
    %c0_2 = arith.constant 0 : index
    %2 = vector.load %arg2[%c0_1, %c0_2] : memref<10x128xbf16, #tpu.memory_space<vmem>>, vector<10x128xbf16>
    %cst = arith.constant dense<0.000000e+00> : vector<16x128xf32>
    %3 = tpu.matmul %1, %2, %cst {dimension_numbers = #tpu.dot_dimension_numbers<[1], [0], [0], [1], [0, 0, 1, 1], [], []>} : vector<16x10xbf16>, vector<10x128xbf16>, vector<16x128xf32> -> vector<16x128xf32>
    %c0_3 = arith.constant 0 : index
    %c0_4 = arith.constant 0 : index
    %4 = vector.load %arg3[%c0_3, %c0_4] : memref<1x128xf32, #tpu.memory_space<vmem>>, vector<1x128xf32>
    %5 = vector.broadcast %4 : vector<1x128xf32> to vector<16x128xf32>
    %6 = arith.addf %3, %5 : vector<16x128xf32>
    %cst_5 = arith.constant 0.000000e+00 : f32
    %7 = vector.broadcast %cst_5 : f32 to vector<16x128xf32>
    %8 = arith.maximumf %6, %7 : vector<16x128xf32>
    %9 = arith.truncf %8 : vector<16x128xf32> to vector<16x128xbf16>
    %c0_6 = arith.constant 0 : index
    %c0_7 = arith.constant 0 : index
    %10 = vector.load %arg4[%c0_6, %c0_7] : memref<128x128xbf16, #tpu.memory_space<vmem>>, vector<128x128xbf16>
    %cst_8 = arith.constant dense<0.000000e+00> : vector<16x128xf32>
    %11 = tpu.matmul %9, %10, %cst_8 {dimension_numbers = #tpu.dot_dimension_numbers<[1], [0], [0], [1], [0, 0, 1, 1], [], []>} : vector<16x128xbf16>, vector<128x128xbf16>, vector<16x128xf32> -> vector<16x128xf32>
    %c0_9 = arith.constant 0 : index
    %c0_10 = arith.constant 0 : index
    %12 = vector.load %arg5[%c0_9, %c0_10] : memref<1x128xf32, #tpu.memory_space<vmem>>, vector<1x128xf32>
    %13 = vector.broadcast %12 : vector<1x128xf32> to vector<16x128xf32>
    %14 = arith.addf %11, %13 : vector<16x128xf32>
    %cst_11 = arith.constant 0.000000e+00 : f32
    %15 = vector.broadcast %cst_11 : f32 to vector<16x128xf32>
    %16 = arith.maximumf %14, %15 : vector<16x128xf32>
    %17 = arith.truncf %16 : vector<16x128xf32> to vector<16x128xbf16>
    %c0_12 = arith.constant 0 : index
    %c0_13 = arith.constant 0 : index
    %18 = vector.load %arg6[%c0_12, %c0_13] : memref<128x2xbf16, #tpu.memory_space<vmem>>, vector<128x2xbf16>
    %cst_14 = arith.constant dense<0.000000e+00> : vector<16x2xf32>
    %19 = tpu.matmul %17, %18, %cst_14 {dimension_numbers = #tpu.dot_dimension_numbers<[1], [0], [0], [1], [0, 0, 1, 1], [], []>} : vector<16x128xbf16>, vector<128x2xbf16>, vector<16x2xf32> -> vector<16x2xf32>
    %c0_15 = arith.constant 0 : index
    %c0_16 = arith.constant 0 : index
    %20 = vector.load %arg7[%c0_15, %c0_16] : memref<1x2xf32, #tpu.memory_space<vmem>>, vector<1x2xf32>
    %21 = vector.broadcast %20 : vector<1x2xf32> to vector<16x2xf32>
    %22 = arith.addf %19, %21 : vector<16x2xf32>
    %c0_17 = arith.constant 0 : index
    %c0_18 = arith.constant 0 : index
    %23 = vector.load %arg8[%c0_17, %c0_18] : memref<16x2xf32, #tpu.memory_space<vmem>>, vector<16x2xf32>
    tpu.vector_store %arg8[%c0_17, %c0_18], %22 {strides = array<i32>} : memref<16x2xf32, #tpu.memory_space<vmem>>, vector<16x2xf32>,
    return
  }
  func.func @transform_0(%arg0: i32) -> (i32, i32) {
    %c0_i32 = arith.constant 0 : i32
    %c0_i32_0 = arith.constant 0 : i32
    return %arg0, %c0_i32 : i32, i32
  }
  func.func @transform_1(%arg0: i32) -> (i32, i32) {
    %c0_i32 = arith.constant 0 : i32
    %c0_i32_0 = arith.constant 0 : i32
    %c0_i32_1 = arith.constant 0 : i32
    return %c0_i32, %c0_i32_0 : i32, i32
  }
  func.func @transform_2(%arg0: i32) -> (i32, i32) {
    %c0_i32 = arith.constant 0 : i32
    %c0_i32_0 = arith.constant 0 : i32
    %c0_i32_1 = arith.constant 0 : i32
    return %c0_i32, %c0_i32_0 : i32, i32
  }
  func.func @transform_3(%arg0: i32) -> (i32, i32) {
    %c0_i32 = arith.constant 0 : i32
    %c0_i32_0 = arith.constant 0 : i32
    %c0_i32_1 = arith.constant 0 : i32
    return %c0_i32, %c0_i32_0 : i32, i32
  }
  func.func @transform_4(%arg0: i32) -> (i32, i32) {
    %c0_i32 = arith.constant 0 : i32
    %c0_i32_0 = arith.constant 0 : i32
    %c0_i32_1 = arith.constant 0 : i32
    return %c0_i32, %c0_i32_0 : i32, i32
  }
  func.func @transform_5(%arg0: i32) -> (i32, i32) {
    %c0_i32 = arith.constant 0 : i32
    %c0_i32_0 = arith.constant 0 : i32
    %c0_i32_1 = arith.constant 0 : i32
    return %c0_i32, %c0_i32_0 : i32, i32
  }
  func.func @transform_6(%arg0: i32) -> (i32, i32) {
    %c0_i32 = arith.constant 0 : i32
    %c0_i32_0 = arith.constant 0 : i32
    %c0_i32_1 = arith.constant 0 : i32
    return %c0_i32, %c0_i32_0 : i32, i32
  }
  func.func @transform_7(%arg0: i32) -> (i32, i32) {
    %c0_i32 = arith.constant 0 : i32
    %c0_i32_0 = arith.constant 0 : i32
    return %arg0, %c0_i32 : i32, i32
  }
}

</mosaic_0001>

<llo_original>
// kernel: tpu_custom_call.1
$region0: #{tpu_custom_call.1}
  #allocation0 [shape = 'u32[]', space=smem, size = 0x4, offset = 0x4, fixed_abs, tag = 'smem constant byte address 0x4 - core index']
  #allocation1 [shape = 'u32[144,128]{1,0:T(1,128)}', space=vmem, size = 0x12000, scoped, tag = 'internal scratch']
  %s0 = inlined_call_operand.vmem [shape: f32[8,10], index: 0, kind: input, shape index: {}]
  %s1 = inlined_call_operand.hbm [shape: bf16[10,128], index: 1, kind: input, shape index: {}]
  %s2 = inlined_call_operand.vmem [shape: f32[1,128], index: 2, kind: input, shape index: {}]
  %s3 = inlined_call_operand.vmem [shape: bf16[128,128], index: 3, kind: input, shape index: {}]
  %s4 = inlined_call_operand.vmem [shape: f32[1,128], index: 4, kind: input, shape index: {}]
  %s5 = inlined_call_operand.vmem [shape: bf16[128,2], index: 5, kind: input, shape index: {}]
  %s6 = inlined_call_operand.vmem [shape: f32[1,2], index: 6, kind: input, shape index: {}]
  %s7 = inlined_call_operand.vmem [shape: f32[8,2], index: 7, kind: output, shape index: {}]
  %s8 = sld [smem:[#allocation0]]
  $region76: #{tpu_custom_call.1} parent=0
    _
  %s10 = ssub.s32 1, %s8
  %s11 = scalar_select 0, %s10, %s8
  $region1: #{tpu_custom_call.1} parent=0
    #allocation2 [shape = 'u8[4096]{0}', space=vmem, size = 0x1000, scoped, tag = 'input window, operand 1, single buffered']
    #allocation3 [shape = 's32[1]{0}', space=sflag, size = 0x4, scoped, tag = 'scoped memory for tpu_custom_call.1']
    #allocation4 [shape = 'u8[8192]{0}', space=vmem, size = 0x2000, scoped, tag = 'output window, operand 0, single buffered']
    %12 = vsyncpa [#allocation3], 0
    // Predicated region
    $region2: #{tpu_custom_call.1} parent=1 // pred_check
      _
    $region3: #{tpu_custom_call.1} parent=1 // pred_check_branch
      %14 = sbr.rel (0) target = $region5
    $region4: #{tpu_custom_call.1} parent=1 // pred_region
      _
    $region5: #{tpu_custom_call.1} parent=1 // pred_fallthru
      _
    // Predicated region
    $region6: #{tpu_custom_call.1} parent=1 // pred_check
      _
    $region7: #{tpu_custom_call.1} parent=1 // pred_check_branch
      %16 = sbr.rel (0) target = $region9
    $region8: #{tpu_custom_call.1} parent=1 // pred_region
      %s18 = ssub.s32 128, 128
      %19 = vsyncadd [#allocation3], %s18
      %s20 = sshll.u32 [#allocation2], 4
      %s21 = int_to_ptr.vmem [resolvable:$true] %s20
      %26 = dma.hbm_to_vmem [thread:$0]  %s1, 128, %s21, [#allocation3], 64, 64, 4
    $region9: #{tpu_custom_call.1} parent=1 // pred_fallthru
      _
    // Predicated region
    $region10: #{tpu_custom_call.1} parent=1 // pred_check
      _
    $region11: #{tpu_custom_call.1} parent=1 // pred_check_branch
      %28 = sbr.rel (0) target = $region13
    $region12: #{tpu_custom_call.1} parent=1 // pred_region
      _
    $region13: #{tpu_custom_call.1} parent=1 // pred_fallthru
      _
    // Predicated region
    $region14: #{tpu_custom_call.1} parent=1 // pred_check
      _
    $region15: #{tpu_custom_call.1} parent=1 // pred_check_branch
      %30 = sbr.rel (0) target = $region17
    $region16: #{tpu_custom_call.1} parent=1 // pred_region
      _
    $region17: #{tpu_custom_call.1} parent=1 // pred_fallthru
      _
    // Predicated region
    $region18: #{tpu_custom_call.1} parent=1 // pred_check
      _
    $region19: #{tpu_custom_call.1} parent=1 // pred_check_branch
      %32 = sbr.rel (0) target = $region21
    $region20: #{tpu_custom_call.1} parent=1 // pred_region
      _
    $region21: #{tpu_custom_call.1} parent=1 // pred_fallthru
      _
    // Predicated region
    $region22: #{tpu_custom_call.1} parent=1 // pred_check
      _
    $region23: #{tpu_custom_call.1} parent=1 // pred_check_branch
      %34 = sbr.rel (0) target = $region25
    $region24: #{tpu_custom_call.1} parent=1 // pred_region
      _
    $region25: #{tpu_custom_call.1} parent=1 // pred_fallthru
      _
    // Predicated region
    $region26: #{tpu_custom_call.1} parent=1 // pred_check
      _
    $region27: #{tpu_custom_call.1} parent=1 // pred_check_branch
      %36 = sbr.rel (0) target = $region29
    $region28: #{tpu_custom_call.1} parent=1 // pred_region
      _
    $region29: #{tpu_custom_call.1} parent=1 // pred_fallthru
      _
    // Predicated region
    $region30: #{tpu_custom_call.1} parent=1 // pred_check
      _
    $region31: #{tpu_custom_call.1} parent=1 // pred_check_branch
      %38 = sbr.rel (0) target = $region33
    $region32: #{tpu_custom_call.1} parent=1 // pred_region
      %39 = dma.done [#allocation3], 128
    $region33: #{tpu_custom_call.1} parent=1 // pred_fallthru
      _
    %v41 = vld [vmem:[%s0] sm:$0xff]
    %v42 = vld [vmem:[%s0 + $0x8] sm:$0xff]
    %v43 = vpack.c.bf16 %v42, %v41
    %v44 = vld [vmem:[#allocation2] sm:$0xf]
    %v45 = vld [vmem:[#allocation2 + $0x4] sm:$0x1]
    %v46 = vld [vmem:[%s2] sm:$0x1]
    %v48 = vlaneseq
    %v49 = vshrl.u32 %v48, 7
    %v50 = vsub.s32 0, %v49
    %v51 = vrot.slane %v46, %v50
    %v55 = vunpack.c.l.b16 %v44
    %v56 = vunpack.c.l.b16 %v45
    %v57 = vpack.c.b16 %v56, %v55
    %vm58 = vcmask 80896
    %v60 = vsel %vm58, %v43, 0
    %vm62 = vcmask 1044480
    %v64 = vsel %vm62, %v57, 0
    %66 = vmatprep.subr.bf16.mxu0 0
    %67 = vmatpush1.bf16.msra.mxu0 %v64
    %68 = vmatprep.subr.bf16.mxu0 0
    %69 = vmatpush1.bf16.msra.mxu0 0
    %70 = vmatprep.subr.bf16.mxu0 0
    %71 = vmatpush1.bf16.msra.mxu0 0
    %72 = vmatprep.subr.bf16.mxu0 0
    %73 = vmatpush1.bf16.msra.mxu0 0
    %74 = vmatprep.subr.bf16.mxu0 0
    %75 = vmatpush1.bf16.msra.mxu0 0
    %76 = vmatprep.subr.bf16.mxu0 0
    %77 = vmatpush1.bf16.msra.mxu0 0
    %78 = vmatprep.subr.bf16.mxu0 0
    %79 = vmatpush1.bf16.msra.mxu0 0
    %80 = vmatprep.subr.bf16.mxu0 0
    %81 = vmatpush1.bf16.msra.mxu0 0
    %82 = vmatprep.subr.bf16.mxu0 0
    %83 = vmatpush1.bf16.msra.mxu0 0
    %84 = vmatprep.subr.bf16.mxu0 0
    %85 = vmatpush1.bf16.msra.mxu0 0
    %86 = vmatprep.subr.bf16.mxu0 0
    %87 = vmatpush1.bf16.msra.mxu0 0
    %88 = vmatprep.subr.bf16.mxu0 0
    %89 = vmatpush1.bf16.msra.mxu0 0
    %90 = vmatprep.subr.bf16.mxu0 0
    %91 = vmatpush1.bf16.msra.mxu0 0
    %92 = vmatprep.subr.bf16.mxu0 0
    %93 = vmatpush1.bf16.msra.mxu0 0
    %94 = vmatprep.subr.bf16.mxu0 0
    %95 = vmatpush1.bf16.msra.mxu0 0
    %96 = vmatprep.subr.bf16.mxu0 0
    %97 = vmatpush1.bf16.msra.mxu0 0
    %98 = vmatprep.mubr.bf16.mxu0 0
    %99 = vmatmul.mubr.bf16.gmra.mrb[0].mxu0 %v60
    %v100 = vpop.f32.mrb[0].mxu0
    %v101 = vadd.f32 %v51, %v100
    %v102 = vpop.f32.mrb[0].mxu0
    %v103 = vpop.f32.mrb[0].mxu0
    %v104 = vadd.f32 %v51, %v103
    %v105 = vpop.f32.mrb[0].mxu0
    %106 = vdwg.mxu0
    %v107 = vmax.f32 %v101, 0.0
    %v108 = vmax.f32 %v104, 0.0
    %v109 = vpack.c.bf16 %v108, %v107
    %v110 = vld [vmem:[%s3] sm:$0xf]
    %v111 = vld [vmem:[%s3 + $0x4] sm:$0xf]
    %v112 = vld [vmem:[%s3 + $0x8] sm:$0xf]
    %v113 = vld [vmem:[%s3 + $0xc] sm:$0xf]
    %v114 = vld [vmem:[%s3 + $0x10] sm:$0xf]
    %v115 = vld [vmem:[%s3 + $0x14] sm:$0xf]
    %v116 = vld [vmem:[%s3 + $0x18] sm:$0xf]
    %v117 = vld [vmem:[%s3 + $0x1c] sm:$0xf]
    %v118 = vld [vmem:[%s3 + $0x20] sm:$0xf]
    %v119 = vld [vmem:[%s3 + $0x24] sm:$0xf]
    %v120 = vld [vmem:[%s3 + $0x28] sm:$0xf]
    %v121 = vld [vmem:[%s3 + $0x2c] sm:$0xf]
    %v122 = vld [vmem:[%s3 + $0x30] sm:$0xf]
    %v123 = vld [vmem:[%s3 + $0x34] sm:$0xf]
    %v124 = vld [vmem:[%s3 + $0x38] sm:$0xf]
    %v125 = vld [vmem:[%s3 + $0x3c] sm:$0xf]
    %v126 = vld [vmem:[%s4] sm:$0x1]
    %v128 = vlaneseq
    %v129 = vshrl.u32 %v128, 7
    %v130 = vsub.s32 0, %v129
    %v131 = vrot.slane %v126, %v130
    %v149 = vunpack.c.l.b16 %v110
    %v150 = vunpack.c.l.b16 %v111
    %v151 = vunpack.c.l.b16 %v112
    %v152 = vunpack.c.l.b16 %v113
    %v153 = vunpack.c.l.b16 %v114
    %v154 = vunpack.c.l.b16 %v115
    %v155 = vunpack.c.l.b16 %v116
    %v156 = vunpack.c.l.b16 %v117
    %v157 = vunpack.c.l.b16 %v118
    %v158 = vunpack.c.l.b16 %v119
    %v159 = vunpack.c.l.b16 %v120
    %v160 = vunpack.c.l.b16 %v121
    %v161 = vunpack.c.l.b16 %v122
    %v162 = vunpack.c.l.b16 %v123
    %v163 = vunpack.c.l.b16 %v124
    %v164 = vunpack.c.l.b16 %v125
    %v165 = vpack.c.b16 %v150, %v149
    %v166 = vpack.c.b16 %v152, %v151
    %v167 = vpack.c.b16 %v154, %v153
    %v168 = vpack.c.b16 %v156, %v155
    %v169 = vpack.c.b16 %v158, %v157
    %v170 = vpack.c.b16 %v160, %v159
    %v171 = vpack.c.b16 %v162, %v161
    %v172 = vpack.c.b16 %v164, %v163
    %181 = vmatprep.subr.bf16.mxu0 0
    %182 = vmatpush1.bf16.msra.mxu0 %v165
    %183 = vmatprep.subr.bf16.mxu0 0
    %184 = vmatpush1.bf16.msra.mxu0 %v166
    %185 = vmatprep.subr.bf16.mxu0 0
    %186 = vmatpush1.bf16.msra.mxu0 %v167
    %187 = vmatprep.subr.bf16.mxu0 0
    %188 = vmatpush1.bf16.msra.mxu0 %v168
    %189 = vmatprep.subr.bf16.mxu0 0
    %190 = vmatpush1.bf16.msra.mxu0 %v169
    %191 = vmatprep.subr.bf16.mxu0 0
    %192 = vmatpush1.bf16.msra.mxu0 %v170
    %193 = vmatprep.subr.bf16.mxu0 0
    %194 = vmatpush1.bf16.msra.mxu0 %v171
    %195 = vmatprep.subr.bf16.mxu0 0
    %196 = vmatpush1.bf16.msra.mxu0 %v172
    %197 = vmatprep.subr.bf16.mxu0 0
    %198 = vmatpush1.bf16.msra.mxu0 0
    %199 = vmatprep.subr.bf16.mxu0 0
    %200 = vmatpush1.bf16.msra.mxu0 0
    %201 = vmatprep.subr.bf16.mxu0 0
    %202 = vmatpush1.bf16.msra.mxu0 0
    %203 = vmatprep.subr.bf16.mxu0 0
    %204 = vmatpush1.bf16.msra.mxu0 0
    %205 = vmatprep.subr.bf16.mxu0 0
    %206 = vmatpush1.bf16.msra.mxu0 0
    %207 = vmatprep.subr.bf16.mxu0 0
    %208 = vmatpush1.bf16.msra.mxu0 0
    %209 = vmatprep.subr.bf16.mxu0 0
    %210 = vmatpush1.bf16.msra.mxu0 0
    %211 = vmatprep.subr.bf16.mxu0 0
    %212 = vmatpush1.bf16.msra.mxu0 0
    %213 = vmatprep.mubr.bf16.mxu0 0
    %214 = vmatmul.mubr.bf16.gmra.mrb[0].mxu0 %v109
    %v215 = vpop.f32.mrb[0].mxu0
    %v216 = vadd.f32 %v131, %v215
    %v217 = vpop.f32.mrb[0].mxu0
    %v218 = vpop.f32.mrb[0].mxu0
    %v219 = vadd.f32 %v131, %v218
    %v220 = vpop.f32.mrb[0].mxu0
    %221 = vdwg.mxu0
    %v222 = vmax.f32 %v216, 0.0
    %v223 = vmax.f32 %v219, 0.0
    %v224 = vpack.c.bf16 %v223, %v222
    %v225 = vld [vmem:[%s5] sm:$0xf]
    %v226 = vld [vmem:[%s5 + $0x4] sm:$0xf]
    %v227 = vld [vmem:[%s5 + $0x8] sm:$0xf]
    %v228 = vld [vmem:[%s5 + $0xc] sm:$0xf]
    %v229 = vld [vmem:[%s5 + $0x10] sm:$0xf]
    %v230 = vld [vmem:[%s5 + $0x14] sm:$0xf]
    %v231 = vld [vmem:[%s5 + $0x18] sm:$0xf]
    %v232 = vld [vmem:[%s5 + $0x1c] sm:$0xf]
    %v233 = vld [vmem:[%s5 + $0x20] sm:$0xf]
    %v234 = vld [vmem:[%s5 + $0x24] sm:$0xf]
    %v235 = vld [vmem:[%s5 + $0x28] sm:$0xf]
    %v236 = vld [vmem:[%s5 + $0x2c] sm:$0xf]
    %v237 = vld [vmem:[%s5 + $0x30] sm:$0xf]
    %v238 = vld [vmem:[%s5 + $0x34] sm:$0xf]
    %v239 = vld [vmem:[%s5 + $0x38] sm:$0xf]
    %v240 = vld [vmem:[%s5 + $0x3c] sm:$0xf]
    %v241 = vld [vmem:[%s6] sm:$0x1]
    %v243 = vlaneseq
    %v244 = vshrl.u32 %v243, 7
    %v245 = vsub.s32 0, %v244
    %v246 = vrot.slane %v241, %v245
    %v264 = vunpack.c.l.b16 %v225
    %v265 = vunpack.c.l.b16 %v226
    %v266 = vunpack.c.l.b16 %v227
    %v267 = vunpack.c.l.b16 %v228
    %v268 = vunpack.c.l.b16 %v229
    %v269 = vunpack.c.l.b16 %v230
    %v270 = vunpack.c.l.b16 %v231
    %v271 = vunpack.c.l.b16 %v232
    %v272 = vunpack.c.l.b16 %v233
    %v273 = vunpack.c.l.b16 %v234
    %v274 = vunpack.c.l.b16 %v235
    %v275 = vunpack.c.l.b16 %v236
    %v276 = vunpack.c.l.b16 %v237
    %v277 = vunpack.c.l.b16 %v238
    %v278 = vunpack.c.l.b16 %v239
    %v279 = vunpack.c.l.b16 %v240
    %v280 = vpack.c.b16 %v265, %v264
    %v281 = vpack.c.b16 %v267, %v266
    %v282 = vpack.c.b16 %v269, %v268
    %v283 = vpack.c.b16 %v271, %v270
    %v284 = vpack.c.b16 %v273, %v272
    %v285 = vpack.c.b16 %v275, %v274
    %v286 = vpack.c.b16 %v277, %v276
    %v287 = vpack.c.b16 %v279, %v278
    %296 = vmatprep.subr.bf16.mxu0 0
    %297 = vmatpush1.bf16.msra.mxu0 %v280
    %298 = vmatprep.subr.bf16.mxu0 0
    %299 = vmatpush1.bf16.msra.mxu0 %v281
    %300 = vmatprep.subr.bf16.mxu0 0
    %301 = vmatpush1.bf16.msra.mxu0 %v282
    %302 = vmatprep.subr.bf16.mxu0 0
    %303 = vmatpush1.bf16.msra.mxu0 %v283
    %304 = vmatprep.subr.bf16.mxu0 0
    %305 = vmatpush1.bf16.msra.mxu0 %v284
    %306 = vmatprep.subr.bf16.mxu0 0
    %307 = vmatpush1.bf16.msra.mxu0 %v285
    %308 = vmatprep.subr.bf16.mxu0 0
    %309 = vmatpush1.bf16.msra.mxu0 %v286
    %310 = vmatprep.subr.bf16.mxu0 0
    %311 = vmatpush1.bf16.msra.mxu0 %v287
    %312 = vmatprep.subr.bf16.mxu0 0
    %313 = vmatpush1.bf16.msra.mxu0 0
    %314 = vmatprep.subr.bf16.mxu0 0
    %315 = vmatpush1.bf16.msra.mxu0 0
    %316 = vmatprep.subr.bf16.mxu0 0
    %317 = vmatpush1.bf16.msra.mxu0 0
    %318 = vmatprep.subr.bf16.mxu0 0
    %319 = vmatpush1.bf16.msra.mxu0 0
    %320 = vmatprep.subr.bf16.mxu0 0
    %321 = vmatpush1.bf16.msra.mxu0 0
    %322 = vmatprep.subr.bf16.mxu0 0
    %323 = vmatpush1.bf16.msra.mxu0 0
    %324 = vmatprep.subr.bf16.mxu0 0
    %325 = vmatpush1.bf16.msra.mxu0 0
    %326 = vmatprep.subr.bf16.mxu0 0
    %327 = vmatpush1.bf16.msra.mxu0 0
    %328 = vmatprep.mubr.bf16.mxu0 0
    %329 = vmatmul.mubr.bf16.gmra.mrb[0].mxu0 %v224
    %v330 = vpop.f32.mrb[0].mxu0
    %v331 = vadd.f32 %v246, %v330
    %v332 = vpop.f32.mrb[0].mxu0
    %v333 = vpop.f32.mrb[0].mxu0
    %v334 = vadd.f32 %v246, %v333
    %v335 = vpop.f32.mrb[0].mxu0
    %336 = vdwg.mxu0
    %vm337 = vcmask 15360
    %338 = vst.msk [vmem:[#allocation4] sm:$0xff] %vm337, %v331
    %339 = vst.msk [vmem:[#allocation4 + $0x8] sm:$0xff] %vm337, %v334
    // Predicated region
    $region34: #{tpu_custom_call.1} parent=1 // pred_check
      _
    $region35: #{tpu_custom_call.1} parent=1 // pred_check_branch
      %341 = sbr.rel (0) target = $region37
    $region36: #{tpu_custom_call.1} parent=1 // pred_region
      // Predicated region
      $region38: #{tpu_custom_call.1} parent=36 // pred_check
        _
      $region39: #{tpu_custom_call.1} parent=36 // pred_check_branch
        %343 = sbr.rel (0) target = $region41
      $region40: #{tpu_custom_call.1} parent=36 // pred_region
        // Predicated region
        $region42: #{tpu_custom_call.1} parent=40 // pred_check
          _
        $region43: #{tpu_custom_call.1} parent=40 // pred_check_branch
          %345 = sbr.rel (0) target = $region45
        $region44: #{tpu_custom_call.1} parent=40 // pred_region
          // Predicated region
          $region57: #{tpu_custom_call.1} parent=44 // pred_check
            _
          $region58: #{tpu_custom_call.1} parent=44 // pred_check_branch
            %360 = sbr.rel (0) target = $region60
          $region59: #{tpu_custom_call.1} parent=44 // pred_region
            loop: start=0, step=1, limit=1
            $region61: #{tpu_custom_call.1} parent=59 // loop_pre_header
              _
            $region62: #{tpu_custom_call.1} parent=59 // loop_header
              %s362 = sphi 0, %s366
              %p363 = scmp.ge.s32.totalorder %s362, 1
              %s367 = sphi [#allocation4], [#allocation4]
              %s368 = sphi %s7, %s7
            $region63: #{tpu_custom_call.1} parent=59 // loop_header_branch
              %365 = sbr.rel (%p363) target = $region67
            $region64: #{tpu_custom_call.1} parent=59 // loop_body
              %v369 = vld [vmem:[%s367] sm:$0xff]
              %370 = vst [vmem:[%s368] sm:$0xff] %v369
            $region65: #{tpu_custom_call.1} parent=59 // loop_footer
              %s366 = sadd.s32 1, %s362
            $region66: #{tpu_custom_call.1} parent=59 // loop_footer_branch
              %361 = sbr.rel target = $region62
            $region67: #{tpu_custom_call.1} parent=59 // loop_exit
              _
          $region60: #{tpu_custom_call.1} parent=44 // pred_fallthru
            _
          // Predicated region
          $region68: #{tpu_custom_call.1} parent=44 // pred_check
            _
          $region69: #{tpu_custom_call.1} parent=44 // pred_check_branch
            %372 = sbr.rel target = $region71
          $region70: #{tpu_custom_call.1} parent=44 // pred_region
            _
          $region71: #{tpu_custom_call.1} parent=44 // pred_fallthru
            _
        $region45: #{tpu_custom_call.1} parent=40 // pred_fallthru
          _
        // Predicated region
        $region46: #{tpu_custom_call.1} parent=40 // pred_check
          _
        $region47: #{tpu_custom_call.1} parent=40 // pred_check_branch
          %347 = sbr.rel target = $region49
        $region48: #{tpu_custom_call.1} parent=40 // pred_region
          loop: start=0, step=1, limit=1
          $region50: #{tpu_custom_call.1} parent=48 // loop_pre_header
            _
          $region51: #{tpu_custom_call.1} parent=48 // loop_header
            %s350 = sphi 0, %s354
            %p351 = scmp.ge.s32.totalorder %s350, 1
            %s355 = sphi [#allocation4], [#allocation4]
            %s356 = sphi %s7, %s7
          $region52: #{tpu_custom_call.1} parent=48 // loop_header_branch
            %353 = sbr.rel (%p351) target = $region56
          $region53: #{tpu_custom_call.1} parent=48 // loop_body
            %v357 = vld [vmem:[%s355] sm:$0xff]
            %358 = vst [vmem:[%s356] sm:$0xff] %v357
          $region54: #{tpu_custom_call.1} parent=48 // loop_footer
            %s354 = sadd.s32 1, %s350
          $region55: #{tpu_custom_call.1} parent=48 // loop_footer_branch
            %349 = sbr.rel target = $region51
          $region56: #{tpu_custom_call.1} parent=48 // loop_exit
            _
        $region49: #{tpu_custom_call.1} parent=40 // pred_fallthru
          _
      $region41: #{tpu_custom_call.1} parent=36 // pred_fallthru
        _
      %373 = vnop
    $region37: #{tpu_custom_call.1} parent=1 // pred_fallthru
      _
    // Predicated region
    $region72: #{tpu_custom_call.1} parent=1 // pred_check
      _
    $region73: #{tpu_custom_call.1} parent=1 // pred_check_branch
      %375 = sbr.rel (0) target = $region75
    $region74: #{tpu_custom_call.1} parent=1 // pred_region
      _
    $region75: #{tpu_custom_call.1} parent=1 // pred_fallthru
      _
    %376 = vsyncpa [#allocation3], 1

</llo_original>
